<compile_context>
chip_gen: v6e
topology: v6e:2x2x1
jax: 0.10.0
libtpu: 0.0.40
codegen_flags: <defaults>
</compile_context>

<pallas_src>
import jax
import jax.numpy as jnp
from jax.experimental import pallas as pl
from jax.experimental.pallas import tpu as pltpu


def _copy_kernel(x_ref, o_ref):
    # Identity copy of the current block (the `.contiguous()` data movement).
    o_ref[...] = x_ref[...]


def _sublane_multiple(dtype):
    # (8,128) vreg tiling; sub-32-bit dtypes pack along sublanes:
    # f32 -> 8, bf16 -> 16, int8/fp8 -> 32.
    itemsize = jnp.dtype(dtype).itemsize
    return 8 * max(1, 4 // max(1, itemsize))


def _budgets():
    """Returns (target_block_bytes, vmem_limit_bytes), generation-aware.

    Double-buffered in+out footprint is ~4x block_bytes, so:
      * v5e/v6e (128 MiB physical VMEM): 8 MiB blocks, 64 MiB scoped limit.
      * v7x / unknown (64 MiB physical): 4 MiB blocks, 48 MiB scoped limit.
    The explicit limit also lifts v5e's 16 MiB scoped default.
    """
    block_bytes = 4 << 20
    vmem_limit = 48 << 20
    try:
        info = pltpu.get_tpu_info()
        vmem_cap = getattr(info, "vmem_capacity_bytes", 0) or 0
        if vmem_cap >= (100 << 20):  # v5e / v6e class chips
            block_bytes = 8 << 20
            vmem_limit = 64 << 20
    except Exception:
        pass
    return block_bytes, vmem_limit


def _copy_2d(x2, tile_m, tile_n, grid, vmem_limit):
    """Bandwidth-bound tiled copy of a 2-D array with the given block shape."""
    M, N = x2.shape
    itemsize = jnp.dtype(x2.dtype).itemsize
    if len(grid) == 1:
        index_map = lambda i: (i, 0)
        dims = ("parallel",)
    else:
        index_map = lambda i, j: (i, j)
        dims = ("parallel", "parallel")
    return pl.pallas_call(
        _copy_kernel,
        out_shape=jax.ShapeDtypeStruct((M, N), x2.dtype),
        grid_spec=pltpu.PrefetchScalarGridSpec(
            num_scalar_prefetch=0,
            grid=grid,
            in_specs=[pl.BlockSpec((tile_m, tile_n), index_map)],
            out_specs=pl.BlockSpec((tile_m, tile_n), index_map),
        ),
        compiler_params=pltpu.CompilerParams(
            dimension_semantics=dims,
            vmem_limit_bytes=vmem_limit,
        ),
        cost_estimate=pl.CostEstimate(
            flops=0,
            transcendentals=0,
            bytes_accessed=2 * M * N * itemsize,  # read + write, pure HBM traffic
        ),
    )(x2)


def flatten_pallas(x, axis, use_kernel=True):
    """Reproduces Flatten(axis).forward(x) -> shape (left_size, right_size)."""
    shape = x.shape
    left_size = 1
    for i in range(axis):
        left_size *= shape[i]
    right_size = 1
    for i in range(axis, len(shape)):
        right_size *= shape[i]

    if not use_kernel:
        # Recommended production path: `.contiguous()` on an already
        # contiguous buffer is a no-op, so the reshape alone is the answer.
        return x.reshape(left_size, right_size)

    total = left_size * right_size
    itemsize = jnp.dtype(x.dtype).itemsize
    sub_mult = _sublane_multiple(x.dtype)
    block_bytes, vmem_limit = _budgets()

    # --- Canonical lane-dense path: pick C (multiple of 128) dividing total,
    # preferring a choice that leaves at least one full sublane group of rows.
    lanes = None
    for cand in (2048, 1024, 512, 256, 128):
        if total % cand == 0 and (total // cand) >= sub_mult:
            lanes = cand
            break
    if lanes is None:
        for cand in (2048, 1024, 512, 256, 128):
            if total % cand == 0:
                lanes = cand
                break

    if lanes is not None:
        rows = total // lanes
        xc = x.reshape(rows, lanes)  # pure metadata
        row_bytes = lanes * itemsize
        tile_m = max(1, block_bytes // row_bytes)
        tile_m = max(sub_mult, (tile_m // sub_mult) * sub_mult)  # sublane aligned
        if tile_m >= rows:
            tile_m = rows  # full-extent block dim is always legal
        grid = (pl.cdiv(rows, tile_m),)
        out = _copy_2d(xc, tile_m, lanes, grid, vmem_limit)
        return out.reshape(left_size, right_size)  # pure metadata

    # --- Fallback (total not a multiple of 128, i.e. small/odd tensors):
    # 2-D tiling over (left_size, right_size) with hard byte caps on both
    # tile dims; ragged edge blocks are masked by Pallas.
    x2 = x.reshape(left_size, right_size)
    tile_n_max = max(128, ((block_bytes // (sub_mult * itemsize)) // 128) * 128)
    tile_n = right_size if right_size <= tile_n_max else tile_n_max
    tile_m = max(1, block_bytes // max(1, tile_n * itemsize))
    tile_m = max(sub_mult, (tile_m // sub_mult) * sub_mult)
    if tile_m >= left_size:
        tile_m = left_size
    grid = (pl.cdiv(left_size, tile_m), pl.cdiv(right_size, tile_n))
    return _copy_2d(x2, tile_m, tile_n, grid, vmem_limit)


if __name__ == "__main__":
    key = jax.random.PRNGKey(0)

    # Small NCHW input consistent with a conv feature map: N=2, C=4, H=W=16.
    x = jax.random.normal(key, (2, 4, 16, 16), dtype=jnp.float32)
    axis = 1  # typical Caffe Flatten axis

    # Pallas copy-kernel path (canonical lane-dense tiling).
    y = jax.block_until_ready(flatten_pallas(x, axis, use_kernel=True))
    ref = jnp.reshape(x, (2, 4 * 16 * 16))
    assert y.shape == ref.shape, (y.shape, ref.shape)
    assert y.dtype == ref.dtype
    assert bool(jnp.array_equal(y, ref))

    # Odd shape (total not a multiple of 128) exercises the capped fallback.
    x_odd = jax.random.normal(jax.random.PRNGKey(1), (2, 3, 5, 7), dtype=jnp.float32)
    y_odd = jax.block_until_ready(flatten_pallas(x_odd, 2, use_kernel=True))
    ref_odd = jnp.reshape(x_odd, (2 * 3, 5 * 7))
    assert y_odd.shape == ref_odd.shape
    assert bool(jnp.array_equal(y_odd, ref_odd))

    # Metadata-only fast path (recommended for production): no kernel at all.
    y_fast = jax.block_until_ready(flatten_pallas(x, axis, use_kernel=False))
    assert bool(jnp.array_equal(y_fast, ref))

    print("KERNEL_OK")
</pallas_src>

<mosaic_0001>
module attributes {stable_mosaic.version = 11 : i64} {
  func.func @_copy_kernel(%arg0: i32, %arg1: memref<8x256xf32, #tpu.memory_space<vmem>>, %arg2: memref<8x256xf32, #tpu.memory_space<vmem>>) attributes {dimension_semantics = [#tpu.dimension_semantics<parallel>], iteration_bounds = array<i64: 1>, scalar_prefetch = 0 : i64, scratch_operands = 0 : i64, tpu.core_type = #tpu.core_type<tc>, window_params = [{transform_indices = @transform_0, window_bounds = array<i64: 8, 256>}, {transform_indices = @transform_1, window_bounds = array<i64: 8, 256>}]} {
    %c0 = arith.constant 0 : index
    %c0_0 = arith.constant 0 : index
    %0 = vector.load %arg1[%c0, %c0_0] : memref<8x256xf32, #tpu.memory_space<vmem>>, vector<8x256xf32>
    %c0_1 = arith.constant 0 : index
    %c0_2 = arith.constant 0 : index
    %1 = vector.load %arg2[%c0_1, %c0_2] : memref<8x256xf32, #tpu.memory_space<vmem>>, vector<8x256xf32>
    tpu.vector_store %arg2[%c0_1, %c0_2], %0 {strides = array<i32>} : memref<8x256xf32, #tpu.memory_space<vmem>>, vector<8x256xf32>,
    return
  }
  func.func @transform_0(%arg0: i32) -> (i32, i32) {
    %c0_i32 = arith.constant 0 : i32
    %c0_i32_0 = arith.constant 0 : i32
    return %arg0, %c0_i32 : i32, i32
  }
  func.func @transform_1(%arg0: i32) -> (i32, i32) {
    %c0_i32 = arith.constant 0 : i32
    %c0_i32_0 = arith.constant 0 : i32
    return %arg0, %c0_i32 : i32, i32
  }
}

</mosaic_0001>

<llo_original>
// kernel: tpu_custom_call.1
$region0: #{tpu_custom_call.1}
  #allocation0 [shape = 'u32[]', space=smem, size = 0x4, offset = 0x4, fixed_abs, tag = 'smem constant byte address 0x4 - core index']
  #allocation1 [shape = 'u32[144,128]{1,0:T(1,128)}', space=vmem, size = 0x12000, scoped, tag = 'internal scratch']
  %s0 = inlined_call_operand.hbm [shape: f32[8,256], index: 0, kind: input, shape index: {}]
  %s1 = inlined_call_operand.hbm [shape: f32[8,256], index: 1, kind: output, shape index: {}]
  %s2 = sld [smem:[#allocation0]]
  $region18: #{tpu_custom_call.1} parent=0
    _
  %s4 = ssub.s32 1, %s2
  %s5 = scalar_select 0, %s4, %s2
  $region1: #{tpu_custom_call.1} parent=0
    #allocation2 [shape = 'u8[8192]{0}', space=vmem, size = 0x2000, scoped, tag = 'input window, operand 0, single buffered']
    #allocation3 [shape = 's32[1]{0}', space=sflag, size = 0x4, scoped, tag = 'scoped memory for tpu_custom_call.1']
    #allocation4 [shape = 's32[1]{0}', space=sflag, size = 0x4, scoped, tag = 'scoped memory for tpu_custom_call.1']
    #allocation5 [shape = 'u8[8192]{0}', space=vmem, size = 0x2000, scoped, tag = 'output window, operand 0, single buffered']
    %6 = vsyncpa [#allocation3], 0
    %7 = vsyncpa [#allocation4], 0
    // Predicated region
    $region2: #{tpu_custom_call.1} parent=1 // pred_check
      _
    $region3: #{tpu_custom_call.1} parent=1 // pred_check_branch
      %9 = sbr.rel (0) target = $region5
    $region4: #{tpu_custom_call.1} parent=1 // pred_region
      %s11 = ssub.s32 256, 256
      %12 = vsyncadd [#allocation3], %s11
      %s14 = sshll.u32 [#allocation2], 4
      %s15 = int_to_ptr.vmem [resolvable:$true] %s14
      %17 = dma.hbm_to_vmem [thread:$0]  %s0, 256, %s15, [#allocation3]
    $region5: #{tpu_custom_call.1} parent=1 // pred_fallthru
      _
    // Predicated region
    $region6: #{tpu_custom_call.1} parent=1 // pred_check
      _
    $region7: #{tpu_custom_call.1} parent=1 // pred_check_branch
      %19 = sbr.rel (0) target = $region9
    $region8: #{tpu_custom_call.1} parent=1 // pred_region
      %20 = dma.done [#allocation3], 256
    $region9: #{tpu_custom_call.1} parent=1 // pred_fallthru
      _
    %v21 = vld [vmem:[#allocation2] sm:$0xff]
    %v22 = vld [vmem:[#allocation2 + $0x8] sm:$0xff]
    %23 = vst [vmem:[#allocation5] sm:$0xff] %v21
    %24 = vst [vmem:[#allocation5 + $0x8] sm:$0xff] %v22
    // Predicated region
    $region10: #{tpu_custom_call.1} parent=1 // pred_check
      _
    $region11: #{tpu_custom_call.1} parent=1 // pred_check_branch
      %26 = sbr.rel (0) target = $region13
    $region12: #{tpu_custom_call.1} parent=1 // pred_region
      %s28 = ssub.s32 256, 256
      %29 = vsyncadd [#allocation4], %s28
      %s31 = sshll.u32 [#allocation5], 4
      %s32 = int_to_ptr.vmem [resolvable:$true] %s31
      %34 = dma.vmem_to_hbm [thread:$0]  %s32, 256, %s1, [#allocation4]
    $region13: #{tpu_custom_call.1} parent=1 // pred_fallthru
      _
    // Predicated region
    $region14: #{tpu_custom_call.1} parent=1 // pred_check
      _
    $region15: #{tpu_custom_call.1} parent=1 // pred_check_branch
      %36 = sbr.rel (0) target = $region17
    $region16: #{tpu_custom_call.1} parent=1 // pred_region
      %37 = dma.done [#allocation4], 256
    $region17: #{tpu_custom_call.1} parent=1 // pred_fallthru
      _
    %38 = vsyncpa [#allocation3], 1
    %39 = vsyncpa [#allocation4], 1

</llo_original>
